<compile_context>
chip_gen: v6e
topology: v6e:2x2x1
jax: 0.10.0
libtpu: 0.0.40
codegen_flags: <defaults>
</compile_context>

<pallas_src>
import math
import functools

import jax
import jax.numpy as jnp
from jax import lax
from jax.experimental import pallas as pl
from jax.experimental.pallas import tpu as pltpu


def _tconv_kernel(x_ref, w_ref, o_ref, patches_ref, *, H, W, KH, KW, c_in,
                  c_pad, n_images, neg_slope, compute_dtype):
    """Fused ReplicationPad2d + coords + Conv2d 3x3 + bias + leaky_relu.

    x_ref:       (C, B*H*W)            raw input channels, lanes = (b, h, w)
    w_ref:       (Cout, KH*KW*c_pad)   packed weight (bias in ones-row column)
    o_ref:       (Cout, B*H*W)
    patches_ref: (KH*KW*c_pad, B*H*W)  VMEM scratch for the im2col taps
    """
    HW = H * W
    L = n_images * HW
    f32 = jnp.float32
    cdt = compute_dtype

    # ---- lane index -> per-image (h, w), boundary masks, coord channels -----
    idx = lax.broadcasted_iota(jnp.int32, (1, L), 1)
    if (HW & (HW - 1)) == 0:                       # power-of-two fast path
        pidx = jnp.bitwise_and(idx, HW - 1)        # index within the image
    else:
        pidx = idx % HW
    if (W & (W - 1)) == 0:
        shift_bits = W.bit_length() - 1
        w_idx = jnp.bitwise_and(pidx, W - 1)
        h_idx = jnp.right_shift(pidx, shift_bits)
    else:                                          # not exercised at W=16
        w_idx = pidx % W
        h_idx = pidx // W

    # Masks broadcast ONCE to the full slab shape and reused by all 8 wheres.
    at_top = jnp.broadcast_to(h_idx == 0, (c_pad, L))
    at_bot = jnp.broadcast_to(h_idx == (H - 1), (c_pad, L))
    at_left = jnp.broadcast_to(w_idx == 0, (c_pad, L))
    at_right = jnp.broadcast_to(w_idx == (W - 1), (c_pad, L))

    # torch.linspace(-1, 1, n)[i] == -1 + 2*i/(n-1)
    ci = (h_idx.astype(f32) * (2.0 / (H - 1)) - 1.0).astype(cdt)   # varies along H
    cj = (w_idx.astype(f32) * (2.0 / (W - 1)) - 1.0).astype(cdt)   # varies along W

    # ---- build the (c_pad, L) input slab: [x, ci, cj, ones(bias), zeros] ----
    pieces = [x_ref[...].astype(cdt), ci, cj, jnp.ones((1, L), cdt)]
    n_zero = c_pad - (c_in + 3)
    if n_zero > 0:
        pieces.append(jnp.zeros((n_zero, L), cdt))
    xin = jnp.concatenate(pieces, axis=0)                          # (c_pad, L)

    def shifted(a, s):
        # out[..., f] = a[..., f + s].  Every lane that the rotation pulls from
        # a different image (or wraps around the array) is a boundary lane and
        # is overwritten by the replication-padding fixup below.
        if s == 0:
            return a
        return pltpu.roll(a, (-s) % L, axis=1)

    # ---- im2col: 9 replication-padded taps stored straight to VMEM scratch --
    tap_i = 0
    for kh in range(KH):
        dh = kh - (KH // 2)                        # 3x3 / pad 1 -> dh in {-1,0,1}
        if dh < 0:
            xh = jnp.where(at_top, xin, shifted(xin, dh * W))
        elif dh > 0:
            xh = jnp.where(at_bot, xin, shifted(xin, dh * W))
        else:
            xh = xin
        for kw in range(KW):
            dw = kw - (KW // 2)
            if dw < 0:
                t = jnp.where(at_left, xh, shifted(xh, dw))
            elif dw > 0:
                t = jnp.where(at_right, xh, shifted(xh, dw))
            else:
                t = xh
            patches_ref[pl.ds(tap_i * c_pad, c_pad), :] = t        # static slice
            tap_i += 1

    # ---- one lane-dense matmul on the MXU + fused f32 epilogue ---------------
    acc = jnp.dot(w_ref[...], patches_ref[...],
                  preferred_element_type=jnp.float32)              # bias included
    acc = jnp.where(acc >= 0, acc, neg_slope * acc)                # leaky_relu(0.1)
    o_ref[...] = acc.astype(o_ref.dtype)


def _pack_weight(w_oihw, bias, c_pad):
    """(Cout, Cin, KH, KW) + (Cout,) -> flat (Cout, KH*KW*c_pad).

    Channels are zero-padded from Cin to c_pad (sublane multiple); the bias is
    folded into the column that multiplies the constant-ones input row of the
    first tap, so the kernel needs no separate bias operand or broadcast-add.
    """
    Cout, Cin, KH, KW = w_oihw.shape
    w = jnp.transpose(w_oihw, (0, 2, 3, 1))                       # (Cout, KH, KW, Cin)
    w = jnp.pad(w, ((0, 0), (0, 0), (0, 0), (0, c_pad - Cin)))    # zero-pad channels
    w = w.at[:, 0, 0, Cin].set(bias)                              # bias * ones-row (tap 0)
    return w.reshape(Cout, KH * KW * c_pad).astype(jnp.float32)


def tconv_forward(x_nchw, conv_params, fsize=(3, 3), neg_slope=0.1,
                  compute_dtype=jnp.float32):
    """TConv.forward with coords=True, noise=False, window=False.

    The PyTorch forward applies the activation once AFTER the conv loop; with a
    single conv layer (the only configuration that type-checks, see TODO) this
    is conv -> bias -> leaky_relu, which the kernel reproduces exactly.

    compute_dtype: bfloat16 builds the taps in bf16 at the source (recommended
    on v6e/v7x); keep float32 on v5e and for exact parity with the reference.
    """
    assert tuple(fsize) == (3, 3), "kernel implements the module default fsize=(3,3)"
    # TODO(synk): noise=True / window=True branches and multi-conv sizes are not
    # representable (the PyTorch forward concatenates coords only once, so any
    # second conv has a channel-count mismatch); only one conv is exercised.
    # TODO(synk): the bfloat16 compute path needs its own looser tolerance test
    # before being enabled in production; the 1e-3 check below runs at f32.
    assert len(conv_params) == 1
    w_oihw, bias = conv_params[0]

    B, C, H, W = x_nchw.shape
    Cout, Cin, KH, KW = w_oihw.shape
    assert Cin == C + 2                      # + coord channels
    assert (KH, KW) == tuple(fsize)
    HW = H * W
    L = B * HW                               # batch folded onto the lane axis
    c_pad = ((Cin + 1 + 7) // 8) * 8         # channels + ones row, sublane-aligned
    w_packed = _pack_weight(w_oihw, bias, c_pad).astype(compute_dtype)

    # (B, C, H, W) -> (C, B*HW); a few-KB one-off XLA transpose in the wrapper.
    x_t = jnp.transpose(x_nchw.reshape(B, C, HW), (1, 0, 2)).reshape(C, L)

    kernel = functools.partial(
        _tconv_kernel, H=H, W=W, KH=KH, KW=KW, c_in=C, c_pad=c_pad,
        n_images=B, neg_slope=neg_slope, compute_dtype=compute_dtype)

    out = pl.pallas_call(
        kernel,
        out_shape=jax.ShapeDtypeStruct((Cout, L), jnp.float32),
        grid_spec=pltpu.PrefetchScalarGridSpec(
            num_scalar_prefetch=0,
            grid=(1,),                                              # single fused step
            in_specs=[
                pl.BlockSpec((C, L), lambda i: (0, 0)),             # (C, B*HW)
                pl.BlockSpec((Cout, KH * KW * c_pad), lambda i: (0, 0)),  # resident weight
            ],
            out_specs=pl.BlockSpec((Cout, L), lambda i: (0, 0)),
            scratch_shapes=[pltpu.VMEM((KH * KW * c_pad, L), compute_dtype)],
        ),
        compiler_params=pltpu.CompilerParams(dimension_semantics=("arbitrary",)),
    )(x_t, w_packed)

    # (Cout, B*HW) -> (B, Cout, H, W); another tiny wrapper transpose.
    return jnp.transpose(out.reshape(Cout, B, HW), (1, 0, 2)).reshape(B, Cout, H, W)


def _reference(x_nchw, w_oihw, bias, fsize):
    """Pure-JAX reference of the same forward (for correctness check)."""
    B, C, H, W = x_nchw.shape
    ci = jnp.broadcast_to(jnp.linspace(-1.0, 1.0, H).reshape(1, 1, H, 1), (B, 1, H, W))
    cj = jnp.broadcast_to(jnp.linspace(-1.0, 1.0, W).reshape(1, 1, 1, W), (B, 1, H, W))
    x = jnp.concatenate([x_nchw, ci, cj], axis=1)
    padl, padr = fsize[0] - fsize[0] // 2 - 1, fsize[0] // 2
    padt, padb = fsize[1] - fsize[1] // 2 - 1, fsize[1] // 2
    xp = jnp.pad(x, ((0, 0), (0, 0), (padt, padb), (padl, padr)), mode="edge")
    y = lax.conv_general_dilated(
        xp, w_oihw, window_strides=(1, 1), padding="VALID",
        dimension_numbers=("NCHW", "OIHW", "NCHW"),
        precision=lax.Precision.HIGHEST)
    y = y + bias.reshape(1, -1, 1, 1)
    return jnp.where(y >= 0, y, 0.1 * y)


if __name__ == "__main__":
    B, C, H, W = 2, 4, 16, 16
    sizes = (C, 8)                 # one conv layer: Conv2d(4+2, 8, (3,3))
    fsize = (3, 3)
    KH, KW = fsize
    Cin_total = sizes[0] + 2       # + coord channels
    Cout = sizes[1]

    key = jax.random.PRNGKey(0)
    k_x, k_w, k_b = jax.random.split(key, 3)

    # deterministic parameter init (xavier_normal weight, normal(std=1e-3) bias)
    fan_in = Cin_total * KH * KW
    fan_out = Cout * KH * KW
    std = math.sqrt(2.0 / (fan_in + fan_out))
    w_oihw = jax.random.normal(k_w, (Cout, Cin_total, KH, KW), jnp.float32) * std
    bias = jax.random.normal(k_b, (Cout,), jnp.float32) * 1e-3

    x = jax.random.normal(k_x, (B, C, H, W), jnp.float32)

    fwd = jax.jit(functools.partial(tconv_forward, fsize=fsize))
    y = fwd(x, [(w_oihw, bias)])
    y = jax.block_until_ready(y)

    y_ref = _reference(x, w_oihw, bias, fsize)
    assert y.shape == (B, Cout, H, W), y.shape
    max_err = float(jnp.max(jnp.abs(y - y_ref)))
    assert max_err < 1e-3, max_err

    print("KERNEL_OK")
</pallas_src>

<mosaic_0001>
module attributes {stable_mosaic.version = 11 : i64} {
  func.func @_tconv_kernel(%arg0: i32, %arg1: memref<4x512xf32, #tpu.memory_space<vmem>>, %arg2: memref<8x72xf32, #tpu.memory_space<vmem>>, %arg3: memref<8x512xf32, #tpu.memory_space<vmem>>, %arg4: memref<72x512xf32, #tpu.memory_space<vmem>>) attributes {dimension_semantics = [#tpu.dimension_semantics<arbitrary>], iteration_bounds = array<i64: 1>, scalar_prefetch = 0 : i64, scratch_operands = 1 : i64, tpu.core_type = #tpu.core_type<tc>, window_params = [{pipeline_mode = #tpu.pipeline_mode<synchronous>, transform_indices = @transform_0, window_bounds = array<i64: 4, 512>}, {pipeline_mode = #tpu.pipeline_mode<synchronous>, transform_indices = @transform_1, window_bounds = array<i64: 8, 72>}, {pipeline_mode = #tpu.pipeline_mode<synchronous>, transform_indices = @transform_2, window_bounds = array<i64: 8, 512>}]} {
    %0 = tpu.iota {dimensions = array<i32: 1>} : vector<1x512xi32>
    %c255_i32 = arith.constant 255 : i32
    %1 = vector.broadcast %c255_i32 : i32 to vector<1x512xi32>
    %2 = arith.andi %0, %1 : vector<1x512xi32>
    %c15_i32 = arith.constant 15 : i32
    %3 = vector.broadcast %c15_i32 : i32 to vector<1x512xi32>
    %4 = arith.andi %2, %3 : vector<1x512xi32>
    %c4_i32 = arith.constant 4 : i32
    %5 = vector.broadcast %c4_i32 : i32 to vector<1x512xi32>
    %6 = arith.shrsi %2, %5 : vector<1x512xi32>
    %c0_i32 = arith.constant 0 : i32
    %7 = vector.broadcast %c0_i32 : i32 to vector<1x512xi32>
    %8 = arith.cmpi eq, %6, %7 : vector<1x512xi32>
    %9 = vector.shape_cast %8 : vector<1x512xi1> to vector<1x512xi1>
    %10 = vector.broadcast %9 : vector<1x512xi1> to vector<8x512xi1>
    %c15_i32_0 = arith.constant 15 : i32
    %11 = vector.broadcast %c15_i32_0 : i32 to vector<1x512xi32>
    %12 = arith.cmpi eq, %6, %11 : vector<1x512xi32>
    %13 = vector.shape_cast %12 : vector<1x512xi1> to vector<1x512xi1>
    %14 = vector.broadcast %13 : vector<1x512xi1> to vector<8x512xi1>
    %c0_i32_1 = arith.constant 0 : i32
    %15 = vector.broadcast %c0_i32_1 : i32 to vector<1x512xi32>
    %16 = arith.cmpi eq, %4, %15 : vector<1x512xi32>
    %17 = vector.shape_cast %16 : vector<1x512xi1> to vector<1x512xi1>
    %18 = vector.broadcast %17 : vector<1x512xi1> to vector<8x512xi1>
    %c15_i32_2 = arith.constant 15 : i32
    %19 = vector.broadcast %c15_i32_2 : i32 to vector<1x512xi32>
    %20 = arith.cmpi eq, %4, %19 : vector<1x512xi32>
    %21 = vector.shape_cast %20 : vector<1x512xi1> to vector<1x512xi1>
    %22 = vector.broadcast %21 : vector<1x512xi1> to vector<8x512xi1>
    %23 = arith.sitofp %6 : vector<1x512xi32> to vector<1x512xf32>
    %cst = arith.constant 0.13333334 : f32
    %24 = vector.broadcast %cst : f32 to vector<1x512xf32>
    %25 = arith.mulf %23, %24 : vector<1x512xf32>
    %cst_3 = arith.constant 1.000000e+00 : f32
    %26 = vector.broadcast %cst_3 : f32 to vector<1x512xf32>
    %27 = arith.subf %25, %26 : vector<1x512xf32>
    %28 = arith.sitofp %4 : vector<1x512xi32> to vector<1x512xf32>
    %cst_4 = arith.constant 0.13333334 : f32
    %29 = vector.broadcast %cst_4 : f32 to vector<1x512xf32>
    %30 = arith.mulf %28, %29 : vector<1x512xf32>
    %cst_5 = arith.constant 1.000000e+00 : f32
    %31 = vector.broadcast %cst_5 : f32 to vector<1x512xf32>
    %32 = arith.subf %30, %31 : vector<1x512xf32>
    %c0 = arith.constant 0 : index
    %c0_6 = arith.constant 0 : index
    %33 = vector.load %arg1[%c0, %c0_6] : memref<4x512xf32, #tpu.memory_space<vmem>>, vector<4x512xf32>
    %cst_7 = arith.constant 1.000000e+00 : f32
    %34 = vector.broadcast %cst_7 : f32 to vector<1x512xf32>
    %cst_8 = arith.constant 0.000000e+00 : f32
    %35 = vector.broadcast %cst_8 : f32 to vector<1x512xf32>
    %36 = tpu.concatenate %33, %27, %32, %34, %35 in 0 : vector<4x512xf32>, vector<1x512xf32>, vector<1x512xf32>, vector<1x512xf32>, vector<1x512xf32> -> vector<8x512xf32>
    %c16_i32 = arith.constant 16 : i32
    %37 = tpu.dynamic_rotate %36 by %c16_i32 dim 1 : vector<8x512xf32>, i32 -> vector<8x512xf32>
    %38 = arith.select %10, %36, %37 : vector<8x512xi1>, vector<8x512xf32>
    %c1_i32 = arith.constant 1 : i32
    %39 = tpu.dynamic_rotate %38 by %c1_i32 dim 1 : vector<8x512xf32>, i32 -> vector<8x512xf32>
    %40 = arith.select %18, %38, %39 : vector<8x512xi1>, vector<8x512xf32>
    %c0_9 = arith.constant 0 : index
    %c0_10 = arith.constant 0 : index
    %41 = vector.load %arg4[%c0_9, %c0_10] : memref<72x512xf32, #tpu.memory_space<vmem>>, vector<8x512xf32>
    tpu.vector_store %arg4[%c0_9, %c0_10], %40 {strides = array<i32>} : memref<72x512xf32, #tpu.memory_space<vmem>>, vector<8x512xf32>,
    %c8 = arith.constant 8 : index
    %c0_11 = arith.constant 0 : index
    %42 = vector.load %arg4[%c8, %c0_11] : memref<72x512xf32, #tpu.memory_space<vmem>>, vector<8x512xf32>
    tpu.vector_store %arg4[%c8, %c0_11], %38 {strides = array<i32>} : memref<72x512xf32, #tpu.memory_space<vmem>>, vector<8x512xf32>,
    %c511_i32 = arith.constant 511 : i32
    %43 = tpu.dynamic_rotate %38 by %c511_i32 dim 1 : vector<8x512xf32>, i32 -> vector<8x512xf32>
    %44 = arith.select %22, %38, %43 : vector<8x512xi1>, vector<8x512xf32>
    %c16 = arith.constant 16 : index
    %c0_12 = arith.constant 0 : index
    %45 = vector.load %arg4[%c16, %c0_12] : memref<72x512xf32, #tpu.memory_space<vmem>>, vector<8x512xf32>
    tpu.vector_store %arg4[%c16, %c0_12], %44 {strides = array<i32>} : memref<72x512xf32, #tpu.memory_space<vmem>>, vector<8x512xf32>,
    %c1_i32_13 = arith.constant 1 : i32
    %46 = tpu.dynamic_rotate %36 by %c1_i32_13 dim 1 : vector<8x512xf32>, i32 -> vector<8x512xf32>
    %47 = arith.select %18, %36, %46 : vector<8x512xi1>, vector<8x512xf32>
    %c24 = arith.constant 24 : index
    %c0_14 = arith.constant 0 : index
    %48 = vector.load %arg4[%c24, %c0_14] : memref<72x512xf32, #tpu.memory_space<vmem>>, vector<8x512xf32>
    tpu.vector_store %arg4[%c24, %c0_14], %47 {strides = array<i32>} : memref<72x512xf32, #tpu.memory_space<vmem>>, vector<8x512xf32>,
    %c32 = arith.constant 32 : index
    %c0_15 = arith.constant 0 : index
    %49 = vector.load %arg4[%c32, %c0_15] : memref<72x512xf32, #tpu.memory_space<vmem>>, vector<8x512xf32>
    tpu.vector_store %arg4[%c32, %c0_15], %36 {strides = array<i32>} : memref<72x512xf32, #tpu.memory_space<vmem>>, vector<8x512xf32>,
    %c511_i32_16 = arith.constant 511 : i32
    %50 = tpu.dynamic_rotate %36 by %c511_i32_16 dim 1 : vector<8x512xf32>, i32 -> vector<8x512xf32>
    %51 = arith.select %22, %36, %50 : vector<8x512xi1>, vector<8x512xf32>
    %c40 = arith.constant 40 : index
    %c0_17 = arith.constant 0 : index
    %52 = vector.load %arg4[%c40, %c0_17] : memref<72x512xf32, #tpu.memory_space<vmem>>, vector<8x512xf32>
    tpu.vector_store %arg4[%c40, %c0_17], %51 {strides = array<i32>} : memref<72x512xf32, #tpu.memory_space<vmem>>, vector<8x512xf32>,
    %c496_i32 = arith.constant 496 : i32
    %53 = tpu.dynamic_rotate %36 by %c496_i32 dim 1 : vector<8x512xf32>, i32 -> vector<8x512xf32>
    %54 = arith.select %14, %36, %53 : vector<8x512xi1>, vector<8x512xf32>
    %c1_i32_18 = arith.constant 1 : i32
    %55 = tpu.dynamic_rotate %54 by %c1_i32_18 dim 1 : vector<8x512xf32>, i32 -> vector<8x512xf32>
    %56 = arith.select %18, %54, %55 : vector<8x512xi1>, vector<8x512xf32>
    %c48 = arith.constant 48 : index
    %c0_19 = arith.constant 0 : index
    %57 = vector.load %arg4[%c48, %c0_19] : memref<72x512xf32, #tpu.memory_space<vmem>>, vector<8x512xf32>
    tpu.vector_store %arg4[%c48, %c0_19], %56 {strides = array<i32>} : memref<72x512xf32, #tpu.memory_space<vmem>>, vector<8x512xf32>,
    %c56 = arith.constant 56 : index
    %c0_20 = arith.constant 0 : index
    %58 = vector.load %arg4[%c56, %c0_20] : memref<72x512xf32, #tpu.memory_space<vmem>>, vector<8x512xf32>
    tpu.vector_store %arg4[%c56, %c0_20], %54 {strides = array<i32>} : memref<72x512xf32, #tpu.memory_space<vmem>>, vector<8x512xf32>,
    %c511_i32_21 = arith.constant 511 : i32
    %59 = tpu.dynamic_rotate %54 by %c511_i32_21 dim 1 : vector<8x512xf32>, i32 -> vector<8x512xf32>
    %60 = arith.select %22, %54, %59 : vector<8x512xi1>, vector<8x512xf32>
    %c64 = arith.constant 64 : index
    %c0_22 = arith.constant 0 : index
    %61 = vector.load %arg4[%c64, %c0_22] : memref<72x512xf32, #tpu.memory_space<vmem>>, vector<8x512xf32>
    tpu.vector_store %arg4[%c64, %c0_22], %60 {strides = array<i32>} : memref<72x512xf32, #tpu.memory_space<vmem>>, vector<8x512xf32>,
    %c0_23 = arith.constant 0 : index
    %c0_24 = arith.constant 0 : index
    %62 = vector.load %arg2[%c0_23, %c0_24] : memref<8x72xf32, #tpu.memory_space<vmem>>, vector<8x72xf32>
    %c0_25 = arith.constant 0 : index
    %c0_26 = arith.constant 0 : index
    %63 = vector.load %arg4[%c0_25, %c0_26] : memref<72x512xf32, #tpu.memory_space<vmem>>, vector<72x512xf32>
    %cst_27 = arith.constant dense<0.000000e+00> : vector<8x512xf32>
    %64 = tpu.matmul %62, %63, %cst_27 {dimension_numbers = #tpu.dot_dimension_numbers<[1], [0], [0], [1], [0, 0, 1, 1], [], []>} : vector<8x72xf32>, vector<72x512xf32>, vector<8x512xf32> -> vector<8x512xf32>
    %cst_28 = arith.constant 0.000000e+00 : f32
    %65 = vector.broadcast %cst_28 : f32 to vector<8x512xf32>
    %66 = arith.cmpf oge, %64, %65 : vector<8x512xf32>
    %cst_29 = arith.constant 1.000000e-01 : f32
    %67 = vector.broadcast %cst_29 : f32 to vector<8x512xf32>
    %68 = arith.mulf %67, %64 : vector<8x512xf32>
    %69 = arith.select %66, %64, %68 : vector<8x512xi1>, vector<8x512xf32>
    %c0_30 = arith.constant 0 : index
    %c0_31 = arith.constant 0 : index
    %70 = vector.load %arg3[%c0_30, %c0_31] : memref<8x512xf32, #tpu.memory_space<vmem>>, vector<8x512xf32>
    tpu.vector_store %arg3[%c0_30, %c0_31], %69 {strides = array<i32>} : memref<8x512xf32, #tpu.memory_space<vmem>>, vector<8x512xf32>,
    return
  }
  func.func @transform_0(%arg0: i32) -> (i32, i32) {
    %c0_i32 = arith.constant 0 : i32
    %c0_i32_0 = arith.constant 0 : i32
    %c0_i32_1 = arith.constant 0 : i32
    return %c0_i32, %c0_i32_0 : i32, i32
  }
  func.func @transform_1(%arg0: i32) -> (i32, i32) {
    %c0_i32 = arith.constant 0 : i32
    %c0_i32_0 = arith.constant 0 : i32
    %c0_i32_1 = arith.constant 0 : i32
    return %c0_i32, %c0_i32_0 : i32, i32
  }
  func.func @transform_2(%arg0: i32) -> (i32, i32) {
    %c0_i32 = arith.constant 0 : i32
    %c0_i32_0 = arith.constant 0 : i32
    %c0_i32_1 = arith.constant 0 : i32
    return %c0_i32, %c0_i32_0 : i32, i32
  }
}

</mosaic_0001>

<llo_original>
// kernel: tconv_forward.1
$region0: #{tconv_forward.1}
  #allocation0 [shape = 'u32[]', space=smem, size = 0x4, offset = 0x4, fixed_abs, tag = 'smem constant byte address 0x4 - core index']
  #allocation1 [shape = 'u32[144,128]{1,0:T(1,128)}', space=vmem, size = 0x12000, scoped, tag = 'internal scratch']
  #allocation2 [shape = 'f32[72,512]{1,0:T(8,128)}', space=vmem, size = 0x24000, scoped, tag = 'scratch operand']
  %s0 = inlined_call_operand.vmem [shape: f32[4,512], index: 0, kind: input, shape index: {}]
  %s1 = inlined_call_operand.vmem [shape: f32[8,72], index: 1, kind: input, shape index: {}]
  %s2 = inlined_call_operand.vmem [shape: f32[8,512], index: 2, kind: output, shape index: {}]
  %s3 = sld [smem:[#allocation0]]
  $region18: #{tconv_forward.1} parent=0
    _
  %s5 = ssub.s32 1, %s3
  %s6 = scalar_select 0, %s5, %s3
  // Predicated region
  $region2: #{tconv_forward.1} parent=0 // pred_check
    _
  $region3: #{tconv_forward.1} parent=0 // pred_check_branch
    %8 = sbr.rel (0) target = $region5
  $region4: #{tconv_forward.1} parent=0 // pred_region
    _
  $region5: #{tconv_forward.1} parent=0 // pred_fallthru
    _
  // Predicated region
  $region6: #{tconv_forward.1} parent=0 // pred_check
    _
  $region7: #{tconv_forward.1} parent=0 // pred_check_branch
    %10 = sbr.rel (0) target = $region9
  $region8: #{tconv_forward.1} parent=0 // pred_region
    _
  $region9: #{tconv_forward.1} parent=0 // pred_fallthru
    _
  %v11 = vlaneseq
  %v12 = vand.u32 %v11, 127
  %v13 = vadd.s32 %v12, 128
  %v14 = vadd.s32 %v12, 256
  %v15 = vadd.s32 %v12, 384
  %v16 = vand.u32 %v12, 255
  %v17 = vand.u32 %v13, 255
  %v18 = vand.u32 %v14, 255
  %v19 = vand.u32 %v15, 255
  %v20 = vand.u32 %v16, 15
  %v21 = vand.u32 %v17, 15
  %v22 = vand.u32 %v18, 15
  %v23 = vand.u32 %v19, 15
  %v24 = vshra.s32 %v16, 4
  %v25 = vshra.s32 %v17, 4
  %v26 = vshra.s32 %v18, 4
  %v27 = vshra.s32 %v19, 4
  %vm28 = vcmp.eq.s32.totalorder %v24, 0
  %vm29 = vcmp.eq.s32.totalorder %v25, 0
  %vm30 = vcmp.eq.s32.totalorder %v26, 0
  %vm31 = vcmp.eq.s32.totalorder %v27, 0
  %v32 = vsel %vm28, 1, 0
  %v33 = vsel %vm29, 1, 0
  %v34 = vsel %vm30, 1, 0
  %v35 = vsel %vm31, 1, 0
  %vm36 = vcmp.eq.s32.totalorder %v32, 1
  %vm37 = vcmp.eq.s32.totalorder %v33, 1
  %vm38 = vcmp.eq.s32.totalorder %v34, 1
  %vm39 = vcmp.eq.s32.totalorder %v35, 1
  %vm40 = vcmp.eq.s32.totalorder %v24, 15
  %vm41 = vcmp.eq.s32.totalorder %v25, 15
  %vm42 = vcmp.eq.s32.totalorder %v26, 15
  %vm43 = vcmp.eq.s32.totalorder %v27, 15
  %v44 = vsel %vm40, 1, 0
  %v45 = vsel %vm41, 1, 0
  %v46 = vsel %vm42, 1, 0
  %v47 = vsel %vm43, 1, 0
  %vm48 = vcmp.eq.s32.totalorder %v44, 1
  %vm49 = vcmp.eq.s32.totalorder %v45, 1
  %vm50 = vcmp.eq.s32.totalorder %v46, 1
  %vm51 = vcmp.eq.s32.totalorder %v47, 1
  %vm52 = vcmp.eq.s32.totalorder %v20, 0
  %vm53 = vcmp.eq.s32.totalorder %v21, 0
  %vm54 = vcmp.eq.s32.totalorder %v22, 0
  %vm55 = vcmp.eq.s32.totalorder %v23, 0
  %v56 = vsel %vm52, 1, 0
  %v57 = vsel %vm53, 1, 0
  %v58 = vsel %vm54, 1, 0
  %v59 = vsel %vm55, 1, 0
  %vm60 = vcmp.eq.s32.totalorder %v56, 1
  %vm61 = vcmp.eq.s32.totalorder %v57, 1
  %vm62 = vcmp.eq.s32.totalorder %v58, 1
  %vm63 = vcmp.eq.s32.totalorder %v59, 1
  %vm64 = vcmp.eq.s32.totalorder %v20, 15
  %vm65 = vcmp.eq.s32.totalorder %v21, 15
  %vm66 = vcmp.eq.s32.totalorder %v22, 15
  %vm67 = vcmp.eq.s32.totalorder %v23, 15
  %v68 = vsel %vm64, 1, 0
  %v69 = vsel %vm65, 1, 0
  %v70 = vsel %vm66, 1, 0
  %v71 = vsel %vm67, 1, 0
  %vm72 = vcmp.eq.s32.totalorder %v68, 1
  %vm73 = vcmp.eq.s32.totalorder %v69, 1
  %vm74 = vcmp.eq.s32.totalorder %v70, 1
  %vm75 = vcmp.eq.s32.totalorder %v71, 1
  %v76 = vcvt.s32.f32 %v24
  %v77 = vcvt.s32.f32 %v25
  %v78 = vcvt.s32.f32 %v26
  %v79 = vcvt.s32.f32 %v27
  %v80 = vmul.f32 %v76, 0.13333334
  %v81 = vmul.f32 %v77, 0.13333334
  %v82 = vmul.f32 %v78, 0.13333334
  %v83 = vmul.f32 %v79, 0.13333334
  %v84 = vsub.f32 %v80, 1.0
  %v85 = vsub.f32 %v81, 1.0
  %v86 = vsub.f32 %v82, 1.0
  %v87 = vsub.f32 %v83, 1.0
  %v88 = vcvt.s32.f32 %v20
  %v89 = vcvt.s32.f32 %v21
  %v90 = vcvt.s32.f32 %v22
  %v91 = vcvt.s32.f32 %v23
  %v92 = vmul.f32 %v88, 0.13333334
  %v93 = vmul.f32 %v89, 0.13333334
  %v94 = vmul.f32 %v90, 0.13333334
  %v95 = vmul.f32 %v91, 0.13333334
  %v96 = vsub.f32 %v92, 1.0
  %v97 = vsub.f32 %v93, 1.0
  %v98 = vsub.f32 %v94, 1.0
  %v99 = vsub.f32 %v95, 1.0
  %v100 = vld [vmem:[%s0] sm:$0xff]
  %v101 = vld [vmem:[%s0 + $0x8] sm:$0xff]
  %v104 = vcombine.high %v100, %v100
  %v105 = vcombine.high %v101, %v101
  %vm108 = vcmask 1043456
  %v109 = vsel %vm108, %v100, %v84
  %v110 = vsel %vm108, %v104, %v85
  %v111 = vsel %vm108, %v101, %v86
  %v112 = vsel %vm108, %v105, %v87
  %vm113 = vcmask 1044480
  %v114 = vsel %vm113, %v109, %v96
  %v115 = vsel %vm113, %v110, %v97
  %v116 = vsel %vm113, %v111, %v98
  %v117 = vsel %vm113, %v112, %v99
  %vm118 = vcmask 1045504
  %v119 = vsel %vm118, %v114, 1.0
  %v120 = vsel %vm118, %v115, 1.0
  %v121 = vsel %vm118, %v116, 1.0
  %v122 = vsel %vm118, %v117, 1.0
  %vm123 = vcmask 1046528
  %v124 = vsel %vm123, %v119, 0.0
  %v125 = vsel %vm123, %v120, 0.0
  %v126 = vsel %vm123, %v121, 0.0
  %v127 = vsel %vm123, %v122, 0.0
  %128 = vrot.lane.b32.xlu0 %v124, 16
  %v129 = vpop.permute.xlu0 %128
  %130 = vrot.lane.b32.xlu0 %v125, 16
  %v131 = vpop.permute.xlu0 %130
  %132 = vrot.lane.b32.xlu0 %v126, 16
  %v133 = vpop.permute.xlu0 %132
  %134 = vrot.lane.b32.xlu0 %v127, 16
  %v135 = vpop.permute.xlu0 %134
  %vm136 = vcmp.lt.s32.totalorder %v12, 16
  %v137 = vsel %vm136, %v133, %v135
  %v138 = vsel %vm136, %v131, %v133
  %v139 = vsel %vm136, %v129, %v131
  %v140 = vsel %vm136, %v135, %v129
  %v141 = vsel %vm36, %v124, %v140
  %v142 = vsel %vm37, %v125, %v139
  %v143 = vsel %vm38, %v126, %v138
  %v144 = vsel %vm39, %v127, %v137
  %145 = vrot.lane.b32.xlu0 %v141, 1
  %v146 = vpop.permute.xlu0 %145
  %147 = vrot.lane.b32.xlu0 %v142, 1
  %v148 = vpop.permute.xlu0 %147
  %149 = vrot.lane.b32.xlu0 %v143, 1
  %v150 = vpop.permute.xlu0 %149
  %151 = vrot.lane.b32.xlu0 %v144, 1
  %v152 = vpop.permute.xlu0 %151
  %vm153 = vcmp.lt.s32.totalorder %v12, 1
  %v154 = vsel %vm153, %v150, %v152
  %v155 = vsel %vm153, %v148, %v150
  %v156 = vsel %vm153, %v146, %v148
  %v157 = vsel %vm153, %v152, %v146
  %v158 = vsel %vm60, %v141, %v157
  %v159 = vsel %vm61, %v142, %v156
  %v160 = vsel %vm62, %v143, %v155
  %v161 = vsel %vm63, %v144, %v154
  %162 = vst [vmem:[#allocation2] sm:$0xff] %v158
  %163 = vst [vmem:[#allocation2 + $0x8] sm:$0xff] %v159
  %164 = vst [vmem:[#allocation2 + $0x10] sm:$0xff] %v160
  %165 = vst [vmem:[#allocation2 + $0x18] sm:$0xff] %v161
  %166 = vst [vmem:[#allocation2 + $0x20] sm:$0xff] %v141
  %167 = vst [vmem:[#allocation2 + $0x28] sm:$0xff] %v142
  %168 = vst [vmem:[#allocation2 + $0x30] sm:$0xff] %v143
  %169 = vst [vmem:[#allocation2 + $0x38] sm:$0xff] %v144
  %170 = vrot.lane.b32.xlu0 %v141, 127
  %v171 = vpop.permute.xlu0 %170
  %172 = vrot.lane.b32.xlu0 %v142, 127
  %v173 = vpop.permute.xlu0 %172
  %174 = vrot.lane.b32.xlu0 %v143, 127
  %v175 = vpop.permute.xlu0 %174
  %176 = vrot.lane.b32.xlu0 %v144, 127
  %v177 = vpop.permute.xlu0 %176
  %vm178 = vcmp.lt.s32.totalorder %v12, 127
  %v179 = vsel %vm178, %v175, %v177
  %v180 = vsel %vm178, %v173, %v175
  %v181 = vsel %vm178, %v171, %v173
  %v182 = vsel %vm178, %v177, %v171
  %v183 = vsel %vm72, %v141, %v181
  %v184 = vsel %vm73, %v142, %v180
  %v185 = vsel %vm74, %v143, %v179
  %v186 = vsel %vm75, %v144, %v182
  %187 = vst [vmem:[#allocation2 + $0x40] sm:$0xff] %v183
  %188 = vst [vmem:[#allocation2 + $0x48] sm:$0xff] %v184
  %189 = vst [vmem:[#allocation2 + $0x50] sm:$0xff] %v185
  %190 = vst [vmem:[#allocation2 + $0x58] sm:$0xff] %v186
  %191 = vrot.lane.b32.xlu0 %v124, 1
  %v192 = vpop.permute.xlu0 %191
  %193 = vrot.lane.b32.xlu0 %v125, 1
  %v194 = vpop.permute.xlu0 %193
  %195 = vrot.lane.b32.xlu0 %v126, 1
  %v196 = vpop.permute.xlu0 %195
  %197 = vrot.lane.b32.xlu0 %v127, 1
  %v198 = vpop.permute.xlu0 %197
  %v199 = vsel %vm153, %v196, %v198
  %v200 = vsel %vm153, %v194, %v196
  %v201 = vsel %vm153, %v192, %v194
  %v202 = vsel %vm153, %v198, %v192
  %v203 = vsel %vm60, %v124, %v202
  %v204 = vsel %vm61, %v125, %v201
  %v205 = vsel %vm62, %v126, %v200
  %v206 = vsel %vm63, %v127, %v199
  %207 = vst [vmem:[#allocation2 + $0x60] sm:$0xff] %v203
  %208 = vst [vmem:[#allocation2 + $0x68] sm:$0xff] %v204
  %209 = vst [vmem:[#allocation2 + $0x70] sm:$0xff] %v205
  %210 = vst [vmem:[#allocation2 + $0x78] sm:$0xff] %v206
  %211 = vst [vmem:[#allocation2 + $0x80] sm:$0xff] %v124
  %212 = vst [vmem:[#allocation2 + $0x88] sm:$0xff] %v125
  %213 = vst [vmem:[#allocation2 + $0x90] sm:$0xff] %v126
  %214 = vst [vmem:[#allocation2 + $0x98] sm:$0xff] %v127
  %215 = vrot.lane.b32.xlu0 %v124, 127
  %v216 = vpop.permute.xlu0 %215
  %217 = vrot.lane.b32.xlu0 %v125, 127
  %v218 = vpop.permute.xlu0 %217
  %219 = vrot.lane.b32.xlu0 %v126, 127
  %v220 = vpop.permute.xlu0 %219
  %221 = vrot.lane.b32.xlu0 %v127, 127
  %v222 = vpop.permute.xlu0 %221
  %v223 = vsel %vm178, %v220, %v222
  %v224 = vsel %vm178, %v218, %v220
  %v225 = vsel %vm178, %v216, %v218
  %v226 = vsel %vm178, %v222, %v216
  %v227 = vsel %vm72, %v124, %v225
  %v228 = vsel %vm73, %v125, %v224
  %v229 = vsel %vm74, %v126, %v223
  %v230 = vsel %vm75, %v127, %v226
  %231 = vst [vmem:[#allocation2 + $0xa0] sm:$0xff] %v227
  %232 = vst [vmem:[#allocation2 + $0xa8] sm:$0xff] %v228
  %233 = vst [vmem:[#allocation2 + $0xb0] sm:$0xff] %v229
  %234 = vst [vmem:[#allocation2 + $0xb8] sm:$0xff] %v230
  %235 = vrot.lane.b32.xlu0 %v124, 112
  %v236 = vpop.permute.xlu0 %235
  %237 = vrot.lane.b32.xlu0 %v125, 112
  %v238 = vpop.permute.xlu0 %237
  %239 = vrot.lane.b32.xlu0 %v126, 112
  %v240 = vpop.permute.xlu0 %239
  %241 = vrot.lane.b32.xlu0 %v127, 112
  %v242 = vpop.permute.xlu0 %241
  %vm243 = vcmp.lt.s32.totalorder %v12, 112
  %v244 = vsel %vm243, %v240, %v242
  %v245 = vsel %vm243, %v238, %v240
  %v246 = vsel %vm243, %v236, %v238
  %v247 = vsel %vm243, %v242, %v236
  %v248 = vsel %vm48, %v124, %v246
  %v249 = vsel %vm49, %v125, %v245
  %v250 = vsel %vm50, %v126, %v244
  %v251 = vsel %vm51, %v127, %v247
  %252 = vrot.lane.b32.xlu0 %v248, 1
  %v253 = vpop.permute.xlu0 %252
  %254 = vrot.lane.b32.xlu0 %v249, 1
  %v255 = vpop.permute.xlu0 %254
  %256 = vrot.lane.b32.xlu0 %v250, 1
  %v257 = vpop.permute.xlu0 %256
  %258 = vrot.lane.b32.xlu0 %v251, 1
  %v259 = vpop.permute.xlu0 %258
  %v260 = vsel %vm153, %v257, %v259
  %v261 = vsel %vm153, %v255, %v257
  %v262 = vsel %vm153, %v253, %v255
  %v263 = vsel %vm153, %v259, %v253
  %v264 = vsel %vm60, %v248, %v263
  %v265 = vsel %vm61, %v249, %v262
  %v266 = vsel %vm62, %v250, %v261
  %v267 = vsel %vm63, %v251, %v260
  %268 = vst [vmem:[#allocation2 + $0xc0] sm:$0xff] %v264
  %269 = vst [vmem:[#allocation2 + $0xc8] sm:$0xff] %v265
  %270 = vst [vmem:[#allocation2 + $0xd0] sm:$0xff] %v266
  %271 = vst [vmem:[#allocation2 + $0xd8] sm:$0xff] %v267
  %272 = vst [vmem:[#allocation2 + $0xe0] sm:$0xff] %v248
  %273 = vst [vmem:[#allocation2 + $0xe8] sm:$0xff] %v249
  %274 = vst [vmem:[#allocation2 + $0xf0] sm:$0xff] %v250
  %275 = vst [vmem:[#allocation2 + $0xf8] sm:$0xff] %v251
  %276 = vrot.lane.b32.xlu0 %v248, 127
  %v277 = vpop.permute.xlu0 %276
  %278 = vrot.lane.b32.xlu0 %v249, 127
  %v279 = vpop.permute.xlu0 %278
  %280 = vrot.lane.b32.xlu0 %v250, 127
  %v281 = vpop.permute.xlu0 %280
  %282 = vrot.lane.b32.xlu0 %v251, 127
  %v283 = vpop.permute.xlu0 %282
  %v284 = vsel %vm178, %v281, %v283
  %v285 = vsel %vm178, %v279, %v281
  %v286 = vsel %vm178, %v277, %v279
  %v287 = vsel %vm178, %v283, %v277
  %v288 = vsel %vm72, %v248, %v286
  %v289 = vsel %vm73, %v249, %v285
  %v290 = vsel %vm74, %v250, %v284
  %v291 = vsel %vm75, %v251, %v287
  %292 = vst [vmem:[#allocation2 + $0x100] sm:$0xff] %v288
  %293 = vst [vmem:[#allocation2 + $0x108] sm:$0xff] %v289
  %294 = vst [vmem:[#allocation2 + $0x110] sm:$0xff] %v290
  %295 = vst [vmem:[#allocation2 + $0x118] sm:$0xff] %v291
  %v296 = vld [vmem:[%s1] sm:$0xff]
  %v297 = vld [vmem:[#allocation2] sm:$0xff]
  %v298 = vld [vmem:[#allocation2 + $0x8] sm:$0xff]
  %v299 = vld [vmem:[#allocation2 + $0x10] sm:$0xff]
  %v300 = vld [vmem:[#allocation2 + $0x18] sm:$0xff]
  %v301 = vld [vmem:[#allocation2 + $0x20] sm:$0xff]
  %v302 = vld [vmem:[#allocation2 + $0x28] sm:$0xff]
  %v303 = vld [vmem:[#allocation2 + $0x30] sm:$0xff]
  %v304 = vld [vmem:[#allocation2 + $0x38] sm:$0xff]
  %v305 = vld [vmem:[#allocation2 + $0x40] sm:$0xff]
  %v306 = vld [vmem:[#allocation2 + $0x48] sm:$0xff]
  %v307 = vld [vmem:[#allocation2 + $0x50] sm:$0xff]
  %v308 = vld [vmem:[#allocation2 + $0x58] sm:$0xff]
  %v309 = vld [vmem:[#allocation2 + $0x60] sm:$0xff]
  %v310 = vld [vmem:[#allocation2 + $0x68] sm:$0xff]
  %v311 = vld [vmem:[#allocation2 + $0x70] sm:$0xff]
  %v312 = vld [vmem:[#allocation2 + $0x78] sm:$0xff]
  %v313 = vld [vmem:[#allocation2 + $0x80] sm:$0xff]
  %v314 = vld [vmem:[#allocation2 + $0x88] sm:$0xff]
  %v315 = vld [vmem:[#allocation2 + $0x90] sm:$0xff]
  %v316 = vld [vmem:[#allocation2 + $0x98] sm:$0xff]
  %v317 = vld [vmem:[#allocation2 + $0xa0] sm:$0xff]
  %v318 = vld [vmem:[#allocation2 + $0xa8] sm:$0xff]
  %v319 = vld [vmem:[#allocation2 + $0xb0] sm:$0xff]
  %v320 = vld [vmem:[#allocation2 + $0xb8] sm:$0xff]
  %v321 = vld [vmem:[#allocation2 + $0xc0] sm:$0xff]
  %v322 = vld [vmem:[#allocation2 + $0xc8] sm:$0xff]
  %v323 = vld [vmem:[#allocation2 + $0xd0] sm:$0xff]
  %v324 = vld [vmem:[#allocation2 + $0xd8] sm:$0xff]
  %v325 = vld [vmem:[#allocation2 + $0xe0] sm:$0xff]
  %v326 = vld [vmem:[#allocation2 + $0xe8] sm:$0xff]
  %v327 = vld [vmem:[#allocation2 + $0xf0] sm:$0xff]
  %v328 = vld [vmem:[#allocation2 + $0xf8] sm:$0xff]
  %v329 = vld [vmem:[#allocation2 + $0x100] sm:$0xff]
  %v330 = vld [vmem:[#allocation2 + $0x108] sm:$0xff]
  %v331 = vld [vmem:[#allocation2 + $0x110] sm:$0xff]
  %v332 = vld [vmem:[#allocation2 + $0x118] sm:$0xff]
  %vm333 = vcmask 588800
  %v335 = vsel %vm333, %v296, 0
  %337 = vmatprep.subr.mxu0 0.0
  %338 = vmatpush1.msra.mxu0 0.0
  %339 = vmatprep.subr.mxu0 0.0
  %340 = vmatpush1.msra.mxu0 0.0
  %341 = vmatprep.subr.mxu0 0.0
  %342 = vmatpush1.msra.mxu0 0.0
  %343 = vmatprep.subr.mxu0 0.0
  %344 = vmatpush1.msra.mxu0 0.0
  %345 = vmatprep.subr.mxu0 0.0
  %346 = vmatpush1.msra.mxu0 0.0
  %347 = vmatprep.subr.mxu0 0.0
  %348 = vmatpush1.msra.mxu0 0.0
  %349 = vmatprep.subr.mxu0 0.0
  %350 = vmatpush1.msra.mxu0 0.0
  %351 = vmatprep.subr.mxu0 %v330
  %352 = vmatpush1.msra.mxu0 %v329
  %353 = vmatprep.subr.mxu0 %v326
  %354 = vmatpush1.msra.mxu0 %v325
  %355 = vmatprep.subr.mxu0 %v322
  %356 = vmatpush1.msra.mxu0 %v321
  %357 = vmatprep.subr.mxu0 %v318
  %358 = vmatpush1.msra.mxu0 %v317
  %359 = vmatprep.subr.mxu0 %v314
  %360 = vmatpush1.msra.mxu0 %v313
  %361 = vmatprep.subr.mxu0 %v310
  %362 = vmatpush1.msra.mxu0 %v309
  %363 = vmatprep.subr.mxu0 %v306
  %364 = vmatpush1.msra.mxu0 %v305
  %365 = vmatprep.subr.mxu0 %v302
  %366 = vmatpush1.msra.mxu0 %v301
  %367 = vmatprep.subr.mxu0 %v298
  %368 = vmatpush1.msra.mxu0 %v297
  %369 = vmatprep.subr.mxu0 0.0
  %370 = vmatpush2.msra.mxu0 0.0
  %371 = vmatprep.subr.mxu0 0.0
  %372 = vmatpush2.msra.mxu0 0.0
  %373 = vmatprep.subr.mxu0 0.0
  %374 = vmatpush2.msra.mxu0 0.0
  %375 = vmatprep.subr.mxu0 0.0
  %376 = vmatpush2.msra.mxu0 0.0
  %377 = vmatprep.subr.mxu0 0.0
  %378 = vmatpush2.msra.mxu0 0.0
  %379 = vmatprep.subr.mxu0 0.0
  %380 = vmatpush2.msra.mxu0 0.0
  %381 = vmatprep.subr.mxu0 0.0
  %382 = vmatpush2.msra.mxu0 0.0
  %383 = vmatprep.subr.mxu0 0.0
  %384 = vmatpush2.msra.mxu0 0.0
  %385 = vmatprep.subr.mxu0 0.0
  %386 = vmatpush2.msra.mxu0 0.0
  %387 = vmatprep.subr.mxu0 0.0
  %388 = vmatpush2.msra.mxu0 0.0
  %389 = vmatprep.subr.mxu0 0.0
  %390 = vmatpush2.msra.mxu0 0.0
  %391 = vmatprep.subr.mxu0 0.0
  %392 = vmatpush2.msra.mxu0 0.0
  %393 = vmatprep.subr.mxu0 0.0
  %394 = vmatpush2.msra.mxu0 0.0
  %395 = vmatprep.subr.mxu0 0.0
  %396 = vmatpush2.msra.mxu0 0.0
  %397 = vmatprep.subr.mxu0 0.0
  %398 = vmatpush2.msra.mxu0 0.0
  %399 = vmatprep.subr.mxu0 0.0
  %400 = vmatpush2.msra.mxu0 0.0
  %401 = vmatprep.mubr.f32.mxu0 0.0
  %402 = vmatmul.mubr.f32.gmra.mxu0 %v335
  %v403 = vpop.f32.mrf.mxu0
  %v404 = vadd.f32 0.0, %v403
  %v405 = vpop.f32.mrf.mxu0
  %v406 = vadd.f32 0.0, %v405
  %407 = vdwg.mxu0
  %408 = vmatprep.subr.mxu0 0.0
  %409 = vmatpush1.msra.mxu0 0.0
  %410 = vmatprep.subr.mxu0 0.0
  %411 = vmatpush1.msra.mxu0 0.0
  %412 = vmatprep.subr.mxu0 0.0
  %413 = vmatpush1.msra.mxu0 0.0
  %414 = vmatprep.subr.mxu0 0.0
  %415 = vmatpush1.msra.mxu0 0.0
  %416 = vmatprep.subr.mxu0 0.0
  %417 = vmatpush1.msra.mxu0 0.0
  %418 = vmatprep.subr.mxu0 0.0
  %419 = vmatpush1.msra.mxu0 0.0
  %420 = vmatprep.subr.mxu0 0.0
  %421 = vmatpush1.msra.mxu0 0.0
  %422 = vmatprep.subr.mxu0 %v332
  %423 = vmatpush1.msra.mxu0 %v331
  %424 = vmatprep.subr.mxu0 %v328
  %425 = vmatpush1.msra.mxu0 %v327
  %426 = vmatprep.subr.mxu0 %v324
  %427 = vmatpush1.msra.mxu0 %v323
  %428 = vmatprep.subr.mxu0 %v320
  %429 = vmatpush1.msra.mxu0 %v319
  %430 = vmatprep.subr.mxu0 %v316
  %431 = vmatpush1.msra.mxu0 %v315
  %432 = vmatprep.subr.mxu0 %v312
  %433 = vmatpush1.msra.mxu0 %v311
  %434 = vmatprep.subr.mxu0 %v308
  %435 = vmatpush1.msra.mxu0 %v307
  %436 = vmatprep.subr.mxu0 %v304
  %437 = vmatpush1.msra.mxu0 %v303
  %438 = vmatprep.subr.mxu0 %v300
  %439 = vmatpush1.msra.mxu0 %v299
  %440 = vmatprep.subr.mxu0 0.0
  %441 = vmatpush2.msra.mxu0 0.0
  %442 = vmatprep.subr.mxu0 0.0
  %443 = vmatpush2.msra.mxu0 0.0
  %444 = vmatprep.subr.mxu0 0.0
  %445 = vmatpush2.msra.mxu0 0.0
  %446 = vmatprep.subr.mxu0 0.0
  %447 = vmatpush2.msra.mxu0 0.0
  %448 = vmatprep.subr.mxu0 0.0
  %449 = vmatpush2.msra.mxu0 0.0
  %450 = vmatprep.subr.mxu0 0.0
  %451 = vmatpush2.msra.mxu0 0.0
  %452 = vmatprep.subr.mxu0 0.0
  %453 = vmatpush2.msra.mxu0 0.0
  %454 = vmatprep.subr.mxu0 0.0
  %455 = vmatpush2.msra.mxu0 0.0
  %456 = vmatprep.subr.mxu0 0.0
  %457 = vmatpush2.msra.mxu0 0.0
  %458 = vmatprep.subr.mxu0 0.0
  %459 = vmatpush2.msra.mxu0 0.0
  %460 = vmatprep.subr.mxu0 0.0
  %461 = vmatpush2.msra.mxu0 0.0
  %462 = vmatprep.subr.mxu0 0.0
  %463 = vmatpush2.msra.mxu0 0.0
  %464 = vmatprep.subr.mxu0 0.0
  %465 = vmatpush2.msra.mxu0 0.0
  %466 = vmatprep.subr.mxu0 0.0
  %467 = vmatpush2.msra.mxu0 0.0
  %468 = vmatprep.subr.mxu0 0.0
  %469 = vmatpush2.msra.mxu0 0.0
  %470 = vmatprep.subr.mxu0 0.0
  %471 = vmatpush2.msra.mxu0 0.0
  %472 = vmatprep.mubr.f32.mxu0 0.0
  %473 = vmatmul.mubr.f32.gmra.mxu0 %v335
  %v474 = vpop.f32.mrf.mxu0
  %v475 = vadd.f32 0.0, %v474
  %v476 = vpop.f32.mrf.mxu0
  %v477 = vadd.f32 0.0, %v476
  %478 = vdwg.mxu0
  %vm479 = vcmp.ge.f32.partialorder %v404, 0.0
  %vm480 = vcmp.ge.f32.partialorder %v406, 0.0
  %vm481 = vcmp.ge.f32.partialorder %v475, 0.0
  %vm482 = vcmp.ge.f32.partialorder %v477, 0.0
  %v483 = vmul.f32 %v404, 0.1
  %v484 = vmul.f32 %v406, 0.1
  %v485 = vmul.f32 %v475, 0.1
  %v486 = vmul.f32 %v477, 0.1
  %v487 = vsel %vm479, %v404, %v483
  %v488 = vsel %vm480, %v406, %v484
  %v489 = vsel %vm481, %v475, %v485
  %v490 = vsel %vm482, %v477, %v486
  %491 = vst [vmem:[%s2] sm:$0xff] %v487
  %492 = vst [vmem:[%s2 + $0x8] sm:$0xff] %v488
  %493 = vst [vmem:[%s2 + $0x10] sm:$0xff] %v489
  %494 = vst [vmem:[%s2 + $0x18] sm:$0xff] %v490
  // Predicated region
  $region10: #{tconv_forward.1} parent=0 // pred_check
    _
  $region11: #{tconv_forward.1} parent=0 // pred_check_branch
    %496 = sbr.rel (0) target = $region13
  $region12: #{tconv_forward.1} parent=0 // pred_region
    _
  $region13: #{tconv_forward.1} parent=0 // pred_fallthru
    _
  // Predicated region
  $region14: #{tconv_forward.1} parent=0 // pred_check
    _
  $region15: #{tconv_forward.1} parent=0 // pred_check_branch
    %498 = sbr.rel (0) target = $region17
  $region16: #{tconv_forward.1} parent=0 // pred_region
    _
  $region17: #{tconv_forward.1} parent=0 // pred_fallthru
    _

</llo_original>
